<compile_context>
chip_gen: v5e
topology: v5e:2x2
jax: 0.10.0
libtpu: 0.0.40
codegen_flags: <defaults>
</compile_context>

<pallas_src>
import jax
import jax.numpy as jnp
from jax.experimental import pallas as pl
from jax.experimental.pallas import tpu as pltpu

EPS = 1e-5
_MIB = 1024 * 1024


def _ln_kernel_bias(x_ref, w_ref, b_ref, o_ref):
    x = x_ref[...].astype(jnp.float32)                    # (tr, D)
    inv_d = jnp.float32(1.0 / x_ref.shape[-1])
    mean = jnp.sum(x, axis=-1, keepdims=True) * inv_d     # (tr, 1)
    xc = x - mean
    var = jnp.sum(xc * xc, axis=-1, keepdims=True) * inv_d  # centered, >= 0
    inv = jax.lax.rsqrt(var + EPS)                         # EUP slot
    y = xc * inv
    y = y * w_ref[...].astype(jnp.float32) + b_ref[...].astype(jnp.float32)
    o_ref[...] = y.astype(o_ref.dtype)


def _ln_kernel_nobias(x_ref, w_ref, o_ref):
    x = x_ref[...].astype(jnp.float32)
    inv_d = jnp.float32(1.0 / x_ref.shape[-1])
    mean = jnp.sum(x, axis=-1, keepdims=True) * inv_d
    xc = x - mean
    var = jnp.sum(xc * xc, axis=-1, keepdims=True) * inv_d
    inv = jax.lax.rsqrt(var + EPS)
    y = xc * inv * w_ref[...].astype(jnp.float32)
    o_ref[...] = y.astype(o_ref.dtype)


def _tpu_vmem_capacity_bytes():
    """Physical VMEM per TensorCore; conservative fallback if unqueryable."""
    try:
        return int(pltpu.get_tpu_info().vmem_capacity_bytes)
    except Exception:
        return 64 * _MIB  # v7x per-TC capacity (smallest of current gens)


def _pick_target_block_bytes(vmem_capacity, itemsize):
    """Input-block byte target, generation- and dtype-aware."""
    if vmem_capacity >= 96 * _MIB:       # v5e / v6e: 128 MiB VMEM
        target = 12 * _MIB
    else:                                # v7x: 64 MiB per TC
        target = 4 * _MIB
    # In-kernel f32 materialization adds (4/itemsize) x block_bytes of live
    # VMEM for sub-f32 inputs; shrink the block target accordingly.
    widen = max(4 // max(itemsize, 1), 1)
    return max(target // widen, 1 * _MIB)


def _pick_row_tile(R, D, itemsize, target_block_bytes):
    """Rows per grid step: ~target_block_bytes of input, multiple of 16."""
    rt = target_block_bytes // max(D * itemsize, 1)
    rt = max(16, min(int(rt), 8192))     # cap raised 1024 -> 8192 (review)
    rt = (rt // 16) * 16
    # Don't massively overshoot tiny problems.
    rt = min(rt, ((R + 15) // 16) * 16)
    return max(rt, 16)


def layer_norm(x, weight, bias=None, *, row_tile=None,
               target_block_bytes=None, vmem_limit_bytes=None):
    """x: (..., D).  weight: (D,).  bias: (D,) or None."""
    D = x.shape[-1]
    orig_shape = x.shape
    x2 = x.reshape(-1, D)            # metadata-only reshape for contiguous x
    R = x2.shape[0]
    itemsize = jnp.dtype(x.dtype).itemsize

    vmem_capacity = _tpu_vmem_capacity_bytes()
    if target_block_bytes is None:
        target_block_bytes = _pick_target_block_bytes(vmem_capacity, itemsize)
    if row_tile is None:
        row_tile = _pick_row_tile(R, D, itemsize, target_block_bytes)

    if vmem_limit_bytes is None:
        # 2x in + 2x out double buffers + ~3 f32-wide temporaries + headroom.
        block_bytes = row_tile * D * itemsize
        f32_temp_bytes = 3 * row_tile * D * 4
        vmem_limit_bytes = 4 * block_bytes + f32_temp_bytes + 8 * _MIB
        vmem_limit_bytes = max(32 * _MIB, vmem_limit_bytes)
        vmem_limit_bytes = min(vmem_limit_bytes, int(0.9 * vmem_capacity))

    grid = (pl.cdiv(R, row_tile),)   # ragged tail handled by Pallas masking

    x_spec = pl.BlockSpec((row_tile, D), lambda i: (i, 0))
    wb_spec = pl.BlockSpec((1, D), lambda i: (0, 0))
    out_spec = pl.BlockSpec((row_tile, D), lambda i: (i, 0))

    n_param_arrays = 2 if bias is not None else 1
    cost = pl.CostEstimate(
        flops=9 * R * D,
        transcendentals=R,
        bytes_accessed=2 * R * D * itemsize + n_param_arrays * D * itemsize)
    cparams = pltpu.CompilerParams(
        dimension_semantics=("parallel",),   # shards row blocks across TCs
        vmem_limit_bytes=int(vmem_limit_bytes))

    w2 = weight.reshape(1, D)

    if bias is not None:
        b2 = bias.reshape(1, D)
        out = pl.pallas_call(
            _ln_kernel_bias,
            out_shape=jax.ShapeDtypeStruct((R, D), x.dtype),
            grid_spec=pltpu.PrefetchScalarGridSpec(
                num_scalar_prefetch=0,
                grid=grid,
                in_specs=[x_spec, wb_spec, wb_spec],
                out_specs=out_spec),
            compiler_params=cparams,
            cost_estimate=cost,
        )(x2, w2, b2)
    else:
        out = pl.pallas_call(
            _ln_kernel_nobias,
            out_shape=jax.ShapeDtypeStruct((R, D), x.dtype),
            grid_spec=pltpu.PrefetchScalarGridSpec(
                num_scalar_prefetch=0,
                grid=grid,
                in_specs=[x_spec, wb_spec],
                out_specs=out_spec),
            compiler_params=cparams,
            cost_estimate=cost,
        )(x2, w2)

    return out.reshape(orig_shape)


if __name__ == "__main__":
    key = jax.random.PRNGKey(0)
    B, T, D = 2, 8, 32
    x = jax.random.normal(key, (B, T, D), dtype=jnp.float32)

    # Parameter init mirroring nn.Parameter(torch.ones/zeros(ndim))
    weight = jnp.ones((D,), jnp.float32)
    bias = jnp.zeros((D,), jnp.float32)   # bias=True case

    y = layer_norm(x, weight, bias)
    jax.block_until_ready(y)

    # Reference (same semantics as F.layer_norm)
    mean = jnp.mean(x, axis=-1, keepdims=True)
    var = jnp.mean((x - mean) ** 2, axis=-1, keepdims=True)
    ref = (x - mean) * jax.lax.rsqrt(var + EPS) * weight + bias
    assert jnp.allclose(y, ref, atol=1e-4, rtol=1e-4), "mismatch vs reference"

    # bias=False path (module allows bias=None) — dedicated kernel variant
    y_nb = layer_norm(x, weight, None)
    jax.block_until_ready(y_nb)
    ref_nb = (x - mean) * jax.lax.rsqrt(var + EPS) * weight
    assert jnp.allclose(y_nb, ref_nb, atol=1e-4, rtol=1e-4), "mismatch (no bias)"

    # Ragged row count (R=18 rows, not a multiple of the tile).
    x_rag = jax.random.normal(jax.random.PRNGKey(1), (18, D), dtype=jnp.float32)
    y_rag = layer_norm(x_rag, weight, bias)
    jax.block_until_ready(y_rag)
    m_r = jnp.mean(x_rag, axis=-1, keepdims=True)
    v_r = jnp.mean((x_rag - m_r) ** 2, axis=-1, keepdims=True)
    ref_rag = (x_rag - m_r) * jax.lax.rsqrt(v_r + EPS) * weight + bias
    assert jnp.allclose(y_rag, ref_rag, atol=1e-4, rtol=1e-4), "mismatch (ragged)"

    # bf16 path exercises the widen-aware block sizing.
    x_bf = x.astype(jnp.bfloat16)
    y_bf = layer_norm(x_bf, weight.astype(jnp.bfloat16), bias.astype(jnp.bfloat16))
    jax.block_until_ready(y_bf)
    assert jnp.allclose(y_bf.astype(jnp.float32), ref, atol=3e-2, rtol=3e-2), \
        "mismatch (bf16)"

    print("KERNEL_OK")
</pallas_src>

<mosaic_0001>
module attributes {stable_mosaic.version = 11 : i64} {
  func.func @_ln_kernel_bias(%arg0: i32, %arg1: memref<16x32xf32, #tpu.memory_space<vmem>>, %arg2: memref<1x32xf32, #tpu.memory_space<vmem>>, %arg3: memref<1x32xf32, #tpu.memory_space<vmem>>, %arg4: memref<16x32xf32, #tpu.memory_space<vmem>>) attributes {dimension_semantics = [#tpu.dimension_semantics<parallel>], iteration_bounds = array<i64: 1>, scalar_prefetch = 0 : i64, scratch_operands = 0 : i64, tpu.core_type = #tpu.core_type<tc>, window_params = [{transform_indices = @transform_0, window_bounds = array<i64: 16, 32>}, {pipeline_mode = #tpu.pipeline_mode<synchronous>, transform_indices = @transform_1, window_bounds = array<i64: 1, 32>}, {pipeline_mode = #tpu.pipeline_mode<synchronous>, transform_indices = @transform_2, window_bounds = array<i64: 1, 32>}, {transform_indices = @transform_3, window_bounds = array<i64: 16, 32>}]} {
    %c0 = arith.constant 0 : index
    %c0_0 = arith.constant 0 : index
    %0 = vector.load %arg1[%c0, %c0_0] : memref<16x32xf32, #tpu.memory_space<vmem>>, vector<16x32xf32>
    %cst = arith.constant dense<0.000000e+00> : vector<16xf32>
    %1 = vector.multi_reduction <add>, %0, %cst [1] : vector<16x32xf32> to vector<16xf32>
    %2 = vector.shape_cast %1 : vector<16xf32> to vector<16x1xf32>
    %cst_1 = arith.constant 3.125000e-02 : f32
    %3 = vector.broadcast %cst_1 : f32 to vector<16x1xf32>
    %4 = arith.mulf %2, %3 : vector<16x1xf32>
    %5 = vector.broadcast %4 : vector<16x1xf32> to vector<16x32xf32>
    %6 = arith.subf %0, %5 : vector<16x32xf32>
    %7 = arith.mulf %6, %6 : vector<16x32xf32>
    %cst_2 = arith.constant dense<0.000000e+00> : vector<16xf32>
    %8 = vector.multi_reduction <add>, %7, %cst_2 [1] : vector<16x32xf32> to vector<16xf32>
    %9 = vector.shape_cast %8 : vector<16xf32> to vector<16x1xf32>
    %cst_3 = arith.constant 3.125000e-02 : f32
    %10 = vector.broadcast %cst_3 : f32 to vector<16x1xf32>
    %11 = arith.mulf %9, %10 : vector<16x1xf32>
    %cst_4 = arith.constant 9.99999974E-6 : f32
    %12 = vector.broadcast %cst_4 : f32 to vector<16x1xf32>
    %13 = arith.addf %11, %12 : vector<16x1xf32>
    %14 = math.rsqrt %13 : vector<16x1xf32>
    %15 = vector.broadcast %14 : vector<16x1xf32> to vector<16x32xf32>
    %16 = arith.mulf %6, %15 : vector<16x32xf32>
    %c0_5 = arith.constant 0 : index
    %c0_6 = arith.constant 0 : index
    %17 = vector.load %arg2[%c0_5, %c0_6] : memref<1x32xf32, #tpu.memory_space<vmem>>, vector<1x32xf32>
    %18 = vector.broadcast %17 : vector<1x32xf32> to vector<16x32xf32>
    %19 = arith.mulf %16, %18 : vector<16x32xf32>
    %c0_7 = arith.constant 0 : index
    %c0_8 = arith.constant 0 : index
    %20 = vector.load %arg3[%c0_7, %c0_8] : memref<1x32xf32, #tpu.memory_space<vmem>>, vector<1x32xf32>
    %21 = vector.broadcast %20 : vector<1x32xf32> to vector<16x32xf32>
    %22 = arith.addf %19, %21 : vector<16x32xf32>
    %c0_9 = arith.constant 0 : index
    %c0_10 = arith.constant 0 : index
    %23 = vector.load %arg4[%c0_9, %c0_10] : memref<16x32xf32, #tpu.memory_space<vmem>>, vector<16x32xf32>
    tpu.vector_store %arg4[%c0_9, %c0_10], %22 {strides = array<i32>} : memref<16x32xf32, #tpu.memory_space<vmem>>, vector<16x32xf32>,
    return
  }
  func.func @transform_0(%arg0: i32) -> (i32, i32) {
    %c0_i32 = arith.constant 0 : i32
    %c0_i32_0 = arith.constant 0 : i32
    return %arg0, %c0_i32 : i32, i32
  }
  func.func @transform_1(%arg0: i32) -> (i32, i32) {
    %c0_i32 = arith.constant 0 : i32
    %c0_i32_0 = arith.constant 0 : i32
    %c0_i32_1 = arith.constant 0 : i32
    return %c0_i32, %c0_i32_0 : i32, i32
  }
  func.func @transform_2(%arg0: i32) -> (i32, i32) {
    %c0_i32 = arith.constant 0 : i32
    %c0_i32_0 = arith.constant 0 : i32
    %c0_i32_1 = arith.constant 0 : i32
    return %c0_i32, %c0_i32_0 : i32, i32
  }
  func.func @transform_3(%arg0: i32) -> (i32, i32) {
    %c0_i32 = arith.constant 0 : i32
    %c0_i32_0 = arith.constant 0 : i32
    return %arg0, %c0_i32 : i32, i32
  }
}

</mosaic_0001>

<llo_original>
// kernel: tpu_custom_call.1
$region0: #{tpu_custom_call.1}
  #allocation0 [shape = 'u32[]', space=smem, size = 0x4, offset = 0x4, fixed_abs, tag = 'smem constant byte address 0x4 - core index']
  #allocation1 [shape = 'u32[72,128]{1,0:T(1,128)}', space=vmem, size = 0x9000, scoped, tag = 'internal scratch']
  %s0 = inlined_call_operand.hbm [shape: f32[16,32], index: 0, kind: input, shape index: {}]
  %s1 = inlined_call_operand.hbm [shape: f32[1,32], index: 1, kind: input, shape index: {}]
  %s2 = inlined_call_operand.vmem [shape: f32[1,32], index: 2, kind: input, shape index: {}]
  %s3 = inlined_call_operand.hbm [shape: f32[16,32], index: 3, kind: output, shape index: {}]
  %s4 = sld [smem:[#allocation0]]
  $region30: #{tpu_custom_call.1} parent=0
    _
  %s6 = ssub.s32 1, %s4
  %s7 = scalar_select 0, %s6, %s4
  $region1: #{tpu_custom_call.1} parent=0
    #allocation2 [shape = 'u8[8192]{0}', space=vmem, size = 0x2000, scoped, tag = 'input window, operand 0, single buffered']
    #allocation3 [shape = 's32[1]{0}', space=sflag, size = 0x4, scoped, tag = 'scoped memory for tpu_custom_call.1']
    #allocation4 [shape = 's32[1]{0}', space=sflag, size = 0x4, scoped, tag = 'scoped memory for tpu_custom_call.1']
    #allocation5 [shape = 'u8[512]{0}', space=vmem, size = 0x400, scoped, tag = 'input window, operand 1, single buffered']
    #allocation6 [shape = 's32[1]{0}', space=sflag, size = 0x4, scoped, tag = 'scoped memory for tpu_custom_call.1']
    #allocation7 [shape = 'u8[8192]{0}', space=vmem, size = 0x2000, scoped, tag = 'output window, operand 0, single buffered']
    %8 = vsyncpa [#allocation3], 0
    %9 = vsyncpa [#allocation6], 0
    %10 = vsyncpa [#allocation4], 0
    // Predicated region
    $region2: #{tpu_custom_call.1} parent=1 // pred_check
      _
    $region3: #{tpu_custom_call.1} parent=1 // pred_check_branch
      %12 = sbr.rel (0) target = $region5
    $region4: #{tpu_custom_call.1} parent=1 // pred_region
      %14 = vsyncadd [#allocation3], 0
      %s15 = sshll.u32 %s0, 4
      %s16 = int_to_ptr.hbm [resolvable:$true] %s15
      %s17 = sshll.u32 [#allocation2], 4
      %s18 = int_to_ptr.vmem [resolvable:$true] %s17
      %23 = dma.hbm_to_vmem [thread:$0]  %s16, 256, %s18, [#allocation3], 128, 128, 8
    $region5: #{tpu_custom_call.1} parent=1 // pred_fallthru
      _
    // Predicated region
    $region6: #{tpu_custom_call.1} parent=1 // pred_check
      _
    $region7: #{tpu_custom_call.1} parent=1 // pred_check_branch
      %25 = sbr.rel (0) target = $region9
    $region8: #{tpu_custom_call.1} parent=1 // pred_region
      %27 = vsyncadd [#allocation6], 0
      %s29 = sshll.u32 %s1, 4
      %s30 = int_to_ptr.hbm [resolvable:$true] %s29
      %s31 = sshll.u32 [#allocation5], 4
      %s32 = int_to_ptr.vmem [resolvable:$true] %s31
      %34 = dma.hbm_to_vmem [thread:$0]  %s30, 16, %s32, [#allocation6]
    $region9: #{tpu_custom_call.1} parent=1 // pred_fallthru
      _
    // Predicated region
    $region10: #{tpu_custom_call.1} parent=1 // pred_check
      _
    $region11: #{tpu_custom_call.1} parent=1 // pred_check_branch
      %36 = sbr.rel (0) target = $region13
    $region12: #{tpu_custom_call.1} parent=1 // pred_region
      _
    $region13: #{tpu_custom_call.1} parent=1 // pred_fallthru
      _
    // Predicated region
    $region14: #{tpu_custom_call.1} parent=1 // pred_check
      _
    $region15: #{tpu_custom_call.1} parent=1 // pred_check_branch
      %38 = sbr.rel (0) target = $region17
    $region16: #{tpu_custom_call.1} parent=1 // pred_region
      %40 = dma.done [#allocation3], 256
    $region17: #{tpu_custom_call.1} parent=1 // pred_fallthru
      _
    // Predicated region
    $region18: #{tpu_custom_call.1} parent=1 // pred_check
      _
    $region19: #{tpu_custom_call.1} parent=1 // pred_check_branch
      %42 = sbr.rel (0) target = $region21
    $region20: #{tpu_custom_call.1} parent=1 // pred_region
      %44 = dma.done [#allocation6], 16
    $region21: #{tpu_custom_call.1} parent=1 // pred_fallthru
      _
    %v45 = vld [vmem:[#allocation2] sm:$0xff]
    %v46 = vld [vmem:[#allocation2 + $0x8] sm:$0xff]
    %vm47 = vcmask 261120
    %v48 = vsel %vm47, %v45, 0.0
    %49 = vadd.xlane.f32.xlu0 %v48
    %v50 = vpop.xlane.xlu0 %49
    %v51 = vsel %vm47, %v46, 0.0
    %52 = vadd.xlane.f32.xlu0 %v51
    %v53 = vpop.xlane.xlu0 %52
    %v54 = vmul.f32 %v50, 0.03125
    %v55 = vmul.f32 %v53, 0.03125
    %v56 = vsub.f32 %v45, %v54
    %v57 = vsub.f32 %v46, %v55
    %v58 = vmul.f32 %v56, %v56
    %v59 = vmul.f32 %v57, %v57
    %v60 = vsel %vm47, %v58, 0.0
    %61 = vadd.xlane.f32.xlu0 %v60
    %v62 = vpop.xlane.xlu0 %61
    %v63 = vsel %vm47, %v59, 0.0
    %64 = vadd.xlane.f32.xlu0 %v63
    %v65 = vpop.xlane.xlu0 %64
    %v66 = vmul.f32 %v62, 0.03125
    %v67 = vmul.f32 %v65, 0.03125
    %v68 = vadd.f32 %v66, 1e-05
    %v69 = vadd.f32 %v67, 1e-05
    %v70 = vrsqrt.pop %v68
    %v71 = vmul.f32 %v70, %v68
    %v72 = vmul.f32 %v71, %v70
    %v73 = vmul.f32 0.5, %v72
    %v74 = vsub.f32 1.5, %v73
    %v75 = vmul.f32 %v70, %v74
    %vm76 = vweird.f32 %v68
    %vm77 = vweird.f32 %v70
    %vm78 = vmor %vm76, %vm77
    %v79 = vsel %vm78, %v70, %v75
    %v80 = vrsqrt.pop %v69
    %v81 = vmul.f32 %v80, %v69
    %v82 = vmul.f32 %v81, %v80
    %v83 = vmul.f32 0.5, %v82
    %v84 = vsub.f32 1.5, %v83
    %v85 = vmul.f32 %v80, %v84
    %vm86 = vweird.f32 %v69
    %vm87 = vweird.f32 %v80
    %vm88 = vmor %vm86, %vm87
    %v89 = vsel %vm88, %v80, %v85
    %v90 = vmul.f32 %v56, %v79
    %v91 = vmul.f32 %v57, %v89
    %v92 = vld [vmem:[#allocation5] sm:$0x1]
    %v94 = vperm.slane %v92, 0
    %v96 = vmul.f32 %v90, %v94
    %v97 = vmul.f32 %v91, %v94
    %v98 = vld [vmem:[%s2] sm:$0x1]
    %v100 = vperm.slane %v98, 0
    %v102 = vadd.f32 %v96, %v100
    %v103 = vadd.f32 %v97, %v100
    %104 = vst.msk [vmem:[#allocation7] sm:$0xff] %vm47, %v102
    %105 = vst.msk [vmem:[#allocation7 + $0x8] sm:$0xff] %vm47, %v103
    // Predicated region
    $region22: #{tpu_custom_call.1} parent=1 // pred_check
      _
    $region23: #{tpu_custom_call.1} parent=1 // pred_check_branch
      %107 = sbr.rel (0) target = $region25
    $region24: #{tpu_custom_call.1} parent=1 // pred_region
      %109 = vsyncadd [#allocation4], 0
      %s110 = sshll.u32 [#allocation7], 4
      %s111 = int_to_ptr.vmem [resolvable:$true] %s110
      %s112 = sshll.u32 %s3, 4
      %s113 = int_to_ptr.hbm [resolvable:$true] %s112
      %118 = dma.vmem_to_hbm [thread:$0]  %s111, 256, %s113, [#allocation4], 128, 128, 8
    $region25: #{tpu_custom_call.1} parent=1 // pred_fallthru
      _
    // Predicated region
    $region26: #{tpu_custom_call.1} parent=1 // pred_check
      _
    $region27: #{tpu_custom_call.1} parent=1 // pred_check_branch
      %120 = sbr.rel (0) target = $region29
    $region28: #{tpu_custom_call.1} parent=1 // pred_region
      %122 = dma.done [#allocation4], 256
    $region29: #{tpu_custom_call.1} parent=1 // pred_fallthru
      _
    %123 = vsyncpa [#allocation3], 1
    %124 = vsyncpa [#allocation6], 1
    %125 = vsyncpa [#allocation4], 1

</llo_original>
